<compile_context>
chip_gen: v6e
topology: v6e:2x2x1
jax: 0.10.0
libtpu: 0.0.40
codegen_flags: <defaults>
</compile_context>

<pallas_src>
from typing import NamedTuple, Optional

import jax
import jax.numpy as jnp
from jax.experimental import pallas as pl
from jax.experimental.pallas import tpu as pltpu

_LANE = 128          # vreg lane width: hidden/out feature dims padded to this once
_SUBLANE = 8
_MIB = 1 << 20
_VMEM_CAP = 56 * _MIB              # conservative per-call cap (v7x: 64 MiB / TC)
_VMEM_FLOOR = 32 * _MIB            # never request less than the v6e/v7x default
_RESIDENT_WEIGHT_LIMIT = 16 * _MIB  # keep weights fully VMEM-resident below this


def _round_up(n, m):
    return ((n + m - 1) // m) * m


def _pad_axis(a, axis, target):
    pad = target - a.shape[axis]
    if pad == 0:
        return a
    widths = [(0, 0)] * a.ndim
    widths[axis] = (0, pad)
    return jnp.pad(a, widths)


def _clamp_vmem(nbytes):
    return max(min(int(nbytes), _VMEM_CAP), _VMEM_FLOOR)


class MLPParams(NamedTuple):
    """Lane-padded (and optionally bf16-cast) parameters, prepared once at init."""
    w1: jax.Array       # (Cin, H_p)
    b1: jax.Array       # (1, H_p)
    w2: jax.Array       # (H_p, Cout_p)
    b2: jax.Array       # (1, Cout_p)
    in_channels: int
    out_channels: int


def prepare_params(w1, b1, w2, b2, compute_dtype=None):
    """Pad the hidden/output feature dims to the 128-lane vreg width ONCE.

    Zero padding is exact: padded hidden units are relu(0+0)=0 and contribute
    nothing; padded output columns are zero and sliced off after the kernel.
    The contraction dim Cin is NOT padded (full-array-dim blocks are legal),
    so the f32 forward pass does no per-call padding of x at all.
    `compute_dtype=jnp.bfloat16` enables the MXU-native bf16 path on v6e/v7x
    (accumulation and the bias/ReLU epilogue stay f32 inside the kernel)."""
    cin, hid = w1.shape
    cout = w2.shape[1]
    h_p = _round_up(hid, _LANE)
    cout_p = _round_up(cout, _LANE)
    if compute_dtype is not None:
        w1, b1, w2, b2 = (a.astype(compute_dtype) for a in (w1, b1, w2, b2))
    w1p = _pad_axis(w1, 1, h_p)                            # (Cin, H_p)
    b1p = _pad_axis(b1.reshape(1, hid), 1, h_p)            # (1, H_p)
    w2p = _pad_axis(_pad_axis(w2, 0, h_p), 1, cout_p)      # (H_p, Cout_p)
    b2p = _pad_axis(b2.reshape(1, cout), 1, cout_p)        # (1, Cout_p)
    return MLPParams(w1p, b1p, w2p, b2p, cin, cout)


# --------------------------------------------------------------------------
# Kernels
# --------------------------------------------------------------------------

def _mlp_kernel(x_ref, w1_ref, b1_ref, w2_ref, b2_ref, o_ref):
    # Linear 1 on the MXU (f32 accumulation); bias + ReLU epilogue in f32 (VPU).
    h = jnp.dot(x_ref[...], w1_ref[...], preferred_element_type=jnp.float32)
    h = jnp.maximum(h + b1_ref[...], 0.0)
    # Linear 2 on the MXU (f32 accumulation); bias epilogue in f32.
    o = jnp.dot(h.astype(w2_ref.dtype), w2_ref[...],
                preferred_element_type=jnp.float32)
    o_ref[...] = (o + b2_ref[...]).astype(o_ref.dtype)


def _mlp_hidden_tiled_kernel(x_ref, w1_ref, b1_ref, w2_ref, b2_ref, o_ref,
                             acc_ref):
    # Grid = (row tiles, hidden tiles).  ReLU is elementwise per hidden unit,
    # so tiling H is exact; the hidden axis is the reduction of matmul #2.
    hi = pl.program_id(1)

    @pl.when(hi == 0)
    def _init():
        acc_ref[...] = jnp.zeros_like(acc_ref)

    h = jnp.dot(x_ref[...], w1_ref[...], preferred_element_type=jnp.float32)
    h = jnp.maximum(h + b1_ref[...], 0.0)
    acc_ref[...] += jnp.dot(h.astype(w2_ref.dtype), w2_ref[...],
                            preferred_element_type=jnp.float32)

    @pl.when(hi == pl.num_programs(1) - 1)
    def _finalize():
        o_ref[...] = (acc_ref[...] + b2_ref[...]).astype(o_ref.dtype)


# --------------------------------------------------------------------------
# Wrapper
# --------------------------------------------------------------------------

def mlp_forward(x, params: MLPParams, *, block_m: int = 512,
                block_h: Optional[int] = None,
                force_hidden_tiling: bool = False):
    """x: (B, in_channels) -> (B, out_channels), dtype preserved."""
    B, cin = x.shape
    assert cin == params.in_channels, (cin, params.in_channels)
    h_p = params.w1.shape[1]
    cout_p = params.w2.shape[1]
    cout = params.out_channels
    out_dtype = x.dtype

    # Only a dtype cast (for the optional bf16 path) touches x per call.
    xc = x.astype(params.w1.dtype)
    in_item = xc.dtype.itemsize
    w_item = params.w1.dtype.itemsize
    out_item = jnp.dtype(out_dtype).itemsize
    cin_v = _round_up(cin, _LANE)   # VMEM footprint of the Cin axis (lane pad)

    weight_bytes = int(sum(int(a.size) * w_item
                           for a in (params.w1, params.b1, params.w2, params.b2)))
    cost = pl.CostEstimate(
        flops=2 * B * (cin * h_p + h_p * cout_p),
        transcendentals=0,
        bytes_accessed=B * cin * in_item + weight_bytes + B * cout_p * out_item,
    )

    # -------- small batch: gridless single shot, everything resident --------
    small_bytes = (B * cin_v * in_item + weight_bytes + B * cout_p * out_item
                   + B * (h_p + cout_p) * 4)            # f32 intermediates
    small_limit = small_bytes * 5 // 4 + 2 * _MIB
    if (not force_hidden_tiling and B <= block_m and small_limit <= _VMEM_CAP):
        out_p = pl.pallas_call(
            _mlp_kernel,
            out_shape=jax.ShapeDtypeStruct((B, cout_p), out_dtype),
            in_specs=[pl.BlockSpec(memory_space=pltpu.MemorySpace.VMEM)] * 5,
            out_specs=pl.BlockSpec(memory_space=pltpu.MemorySpace.VMEM),
            compiler_params=pltpu.CompilerParams(
                vmem_limit_bytes=_clamp_vmem(small_limit)),
            cost_estimate=cost,
        )(xc, params.w1, params.b1, params.w2, params.b2)
        return out_p[:, :cout]

    # -------- large batch: tile over rows (ragged tail handled by Pallas) ----
    block_m = min(block_m, _round_up(B, _SUBLANE))
    n_row = pl.cdiv(B, block_m)
    # Prefer an even number of row steps so v7x's two TensorCores stay balanced
    # under dimension_semantics=("parallel",); harmless on single-TC v5e/v6e.
    if n_row > 1 and n_row % 2:
        block_m = max(_round_up(pl.cdiv(B, n_row + 1), _SUBLANE), _SUBLANE)
        n_row = pl.cdiv(B, block_m)

    use_hidden_tiling = force_hidden_tiling or weight_bytes > _RESIDENT_WEIGHT_LIMIT

    if not use_hidden_tiling:
        # Row-tiled path with both weight matrices fully VMEM-resident
        # (constant index_map; single-buffered when supported).
        est = (2 * weight_bytes                       # headroom if double-buffered
               + 2 * block_m * cin_v * in_item        # pipelined x blocks
               + 2 * block_m * cout_p * out_item      # pipelined out blocks
               + block_m * (h_p + cout_p) * 4)        # f32 intermediates
        vmem_limit = _clamp_vmem(est * 6 // 5 + 2 * _MIB)

        def call(single_buffer_weights):
            wmode = ({"pipeline_mode": pl.Buffered(1)}
                     if single_buffer_weights else {})
            return pl.pallas_call(
                _mlp_kernel,
                out_shape=jax.ShapeDtypeStruct((B, cout_p), out_dtype),
                grid=(n_row,),
                in_specs=[
                    pl.BlockSpec((block_m, cin), lambda i: (i, 0)),
                    pl.BlockSpec((cin, h_p), lambda i: (0, 0), **wmode),
                    pl.BlockSpec((1, h_p), lambda i: (0, 0), **wmode),
                    pl.BlockSpec((h_p, cout_p), lambda i: (0, 0), **wmode),
                    pl.BlockSpec((1, cout_p), lambda i: (0, 0), **wmode),
                ],
                out_specs=pl.BlockSpec((block_m, cout_p), lambda i: (i, 0)),
                compiler_params=pltpu.CompilerParams(
                    dimension_semantics=("parallel",),
                    vmem_limit_bytes=vmem_limit),
                cost_estimate=cost,
            )(xc, params.w1, params.b1, params.w2, params.b2)

        try:
            # Weight blocks never change across grid steps: single-buffer them
            # (1x instead of 2x VMEM; matters most on v7x's 64 MiB).
            out_p = call(True)
        except Exception:  # pl.Buffered(1) unsupported on this jax/libtpu combo
            out_p = call(False)
        return out_p[:, :cout]

    # -------- hidden-dim tiled fallback (weights too big to keep resident) ---
    if block_h is None:
        block_h = min(h_p, 512)
        while h_p % block_h:
            block_h -= _LANE
    assert block_h % _LANE == 0 and h_p % block_h == 0, (block_h, h_p)
    n_h = h_p // block_h

    est = (2 * block_m * cin_v * in_item
           + 2 * (cin_v * block_h + block_h + block_h * cout_p + cout_p) * w_item
           + 2 * block_m * cout_p * out_item
           + block_m * cout_p * 4                  # f32 accumulator scratch
           + block_m * (block_h + cout_p) * 4)     # f32 intermediates
    vmem_limit = _clamp_vmem(est * 6 // 5 + 2 * _MIB)

    out_p = pl.pallas_call(
        _mlp_hidden_tiled_kernel,
        out_shape=jax.ShapeDtypeStruct((B, cout_p), out_dtype),
        grid=(n_row, n_h),
        in_specs=[
            pl.BlockSpec((block_m, cin), lambda i, h: (i, 0)),
            pl.BlockSpec((cin, block_h), lambda i, h: (0, h)),
            pl.BlockSpec((1, block_h), lambda i, h: (0, h)),
            pl.BlockSpec((block_h, cout_p), lambda i, h: (h, 0)),
            pl.BlockSpec((1, cout_p), lambda i, h: (0, 0)),
        ],
        out_specs=pl.BlockSpec((block_m, cout_p), lambda i, h: (i, 0)),
        scratch_shapes=[pltpu.VMEM((block_m, cout_p), jnp.float32)],
        compiler_params=pltpu.CompilerParams(
            dimension_semantics=("parallel", "arbitrary"),
            vmem_limit_bytes=vmem_limit),
        cost_estimate=cost,
    )(xc, params.w1, params.b1, params.w2, params.b2)
    return out_p[:, :cout]


# --------------------------------------------------------------------------
# Init matching PyTorch nn.Linear defaults: U(-1/sqrt(fan_in), 1/sqrt(fan_in))
# --------------------------------------------------------------------------

def init_mlp_params(key, in_channels, hidden_channels, out_channels,
                    dtype=jnp.float32):
    k1, k2, k3, k4 = jax.random.split(key, 4)
    bound1 = 1.0 / jnp.sqrt(in_channels)
    bound2 = 1.0 / jnp.sqrt(hidden_channels)
    w1 = jax.random.uniform(k1, (in_channels, hidden_channels),
                            minval=-bound1, maxval=bound1, dtype=dtype)
    b1 = jax.random.uniform(k2, (hidden_channels,),
                            minval=-bound1, maxval=bound1, dtype=dtype)
    w2 = jax.random.uniform(k3, (hidden_channels, out_channels),
                            minval=-bound2, maxval=bound2, dtype=dtype)
    b2 = jax.random.uniform(k4, (out_channels,),
                            minval=-bound2, maxval=bound2, dtype=dtype)
    return w1, b1, w2, b2


def _reference(x, w1, b1, w2, b2):
    return jnp.maximum(x @ w1 + b1[None, :], 0.0) @ w2 + b2[None, :]


if __name__ == "__main__":
    key = jax.random.PRNGKey(0)
    kx, kp, kx2, kp2 = jax.random.split(key, 4)

    # --- Model 1: Cin=32, H=64, Cout=16 ---
    cin, hid, cout = 32, 64, 16
    w1, b1, w2, b2 = init_mlp_params(kp, cin, hid, cout)
    params = prepare_params(w1, b1, w2, b2)

    # 1) Small batch -> gridless single-shot path.
    x_small = jax.random.normal(kx, (8, cin), dtype=jnp.float32)
    out_small = jax.block_until_ready(mlp_forward(x_small, params))
    assert out_small.shape == (8, cout)
    assert jnp.allclose(out_small, _reference(x_small, w1, b1, w2, b2),
                        atol=5e-4, rtol=1e-4), "small-batch mismatch"

    # 2) Ragged larger batch -> row-tiled resident-weight path (>=2 grid steps).
    x_big = jax.random.normal(kx2, (300, cin), dtype=jnp.float32)
    out_big = jax.block_until_ready(mlp_forward(x_big, params, block_m=128))
    assert out_big.shape == (300, cout)
    assert jnp.allclose(out_big, _reference(x_big, w1, b1, w2, b2),
                        atol=5e-4, rtol=1e-4), "row-tiled mismatch"

    # 3) Hidden-dim tiled accumulator path (forced at a small size to test it).
    hid2 = 256
    w1b, b1b, w2b, b2b = init_mlp_params(kp2, cin, hid2, cout)
    params2 = prepare_params(w1b, b1b, w2b, b2b)
    out_ht = jax.block_until_ready(
        mlp_forward(x_big, params2, block_m=128, block_h=128,
                    force_hidden_tiling=True))
    assert out_ht.shape == (300, cout)
    assert jnp.allclose(out_ht, _reference(x_big, w1b, b1b, w2b, b2b),
                        atol=5e-4, rtol=1e-4), "hidden-tiled mismatch"

    # 4) bf16 MXU fast path (v6e/v7x native rate); f32 accumulation inside.
    params_bf16 = prepare_params(w1, b1, w2, b2, compute_dtype=jnp.bfloat16)
    out_bf16 = jax.block_until_ready(mlp_forward(x_small, params_bf16))
    assert out_bf16.shape == (8, cout)
    assert jnp.allclose(out_bf16.astype(jnp.float32),
                        _reference(x_small, w1, b1, w2, b2),
                        atol=5e-2, rtol=5e-2), "bf16 path mismatch"

    print("KERNEL_OK")
</pallas_src>

<mosaic_0001>
module attributes {stable_mosaic.version = 11 : i64} {
  func.func @_mlp_kernel(%arg0: memref<8x32xf32, #tpu.memory_space<vmem>>, %arg1: memref<32x128xf32, #tpu.memory_space<vmem>>, %arg2: memref<1x128xf32, #tpu.memory_space<vmem>>, %arg3: memref<128x128xf32, #tpu.memory_space<vmem>>, %arg4: memref<1x128xf32, #tpu.memory_space<vmem>>, %arg5: memref<8x128xf32, #tpu.memory_space<vmem>>) attributes {dimension_semantics = [], scalar_prefetch = 0 : i64, scratch_operands = 0 : i64, tpu.core_type = #tpu.core_type<tc>} {
    %c0 = arith.constant 0 : index
    %c0_0 = arith.constant 0 : index
    %0 = vector.load %arg0[%c0, %c0_0] : memref<8x32xf32, #tpu.memory_space<vmem>>, vector<8x32xf32>
    %c0_1 = arith.constant 0 : index
    %c0_2 = arith.constant 0 : index
    %1 = vector.load %arg1[%c0_1, %c0_2] : memref<32x128xf32, #tpu.memory_space<vmem>>, vector<32x128xf32>
    %cst = arith.constant dense<0.000000e+00> : vector<8x128xf32>
    %2 = tpu.matmul %0, %1, %cst {dimension_numbers = #tpu.dot_dimension_numbers<[1], [0], [0], [1], [0, 0, 1, 1], [], []>} : vector<8x32xf32>, vector<32x128xf32>, vector<8x128xf32> -> vector<8x128xf32>
    %c0_3 = arith.constant 0 : index
    %c0_4 = arith.constant 0 : index
    %3 = vector.load %arg2[%c0_3, %c0_4] : memref<1x128xf32, #tpu.memory_space<vmem>>, vector<1x128xf32>
    %4 = vector.broadcast %3 : vector<1x128xf32> to vector<8x128xf32>
    %5 = arith.addf %2, %4 : vector<8x128xf32>
    %cst_5 = arith.constant 0.000000e+00 : f32
    %6 = vector.broadcast %cst_5 : f32 to vector<8x128xf32>
    %7 = arith.maximumf %5, %6 : vector<8x128xf32>
    %c0_6 = arith.constant 0 : index
    %c0_7 = arith.constant 0 : index
    %8 = vector.load %arg3[%c0_6, %c0_7] : memref<128x128xf32, #tpu.memory_space<vmem>>, vector<128x128xf32>
    %cst_8 = arith.constant dense<0.000000e+00> : vector<8x128xf32>
    %9 = tpu.matmul %7, %8, %cst_8 {dimension_numbers = #tpu.dot_dimension_numbers<[1], [0], [0], [1], [0, 0, 1, 1], [], []>} : vector<8x128xf32>, vector<128x128xf32>, vector<8x128xf32> -> vector<8x128xf32>
    %c0_9 = arith.constant 0 : index
    %c0_10 = arith.constant 0 : index
    %10 = vector.load %arg4[%c0_9, %c0_10] : memref<1x128xf32, #tpu.memory_space<vmem>>, vector<1x128xf32>
    %11 = vector.broadcast %10 : vector<1x128xf32> to vector<8x128xf32>
    %12 = arith.addf %9, %11 : vector<8x128xf32>
    %c0_11 = arith.constant 0 : index
    %c0_12 = arith.constant 0 : index
    %13 = vector.load %arg5[%c0_11, %c0_12] : memref<8x128xf32, #tpu.memory_space<vmem>>, vector<8x128xf32>
    tpu.vector_store %arg5[%c0_11, %c0_12], %12 {strides = array<i32>} : memref<8x128xf32, #tpu.memory_space<vmem>>, vector<8x128xf32>,
    return
  }
}

</mosaic_0001>

<llo_original>
// kernel: tpu_custom_call.1
$region0: #{tpu_custom_call.1}
  #allocation0 [shape = 'u32[]', space=smem, size = 0x4, offset = 0x4, fixed_abs, tag = 'smem constant byte address 0x4 - core index']
  #allocation1 [shape = 'u32[144,128]{1,0:T(1,128)}', space=vmem, size = 0x12000, scoped, tag = 'internal scratch']
  %s0 = inlined_call_operand.hbm [shape: f32[8,32], index: 0, kind: input, shape index: {}]
  %s1 = inlined_call_operand.hbm [shape: f32[32,128], index: 1, kind: input, shape index: {}]
  %s2 = inlined_call_operand.vmem [shape: f32[1,128], index: 2, kind: input, shape index: {}]
  %s3 = inlined_call_operand.hbm [shape: f32[128,128], index: 3, kind: input, shape index: {}]
  %s4 = inlined_call_operand.vmem [shape: f32[1,128], index: 4, kind: input, shape index: {}]
  %s5 = inlined_call_operand.hbm [shape: f32[8,128], index: 5, kind: output, shape index: {}]
  %s6 = sld [smem:[#allocation0]]
  $region42: #{tpu_custom_call.1} parent=0
    _
  %s8 = ssub.s32 1, %s6
  %s9 = scalar_select 0, %s8, %s6
  $region1: #{tpu_custom_call.1} parent=0
    #allocation2 [shape = 'u8[4096]{0}', space=vmem, size = 0x1000, scoped, tag = 'input window, operand 0, single buffered']
    #allocation3 [shape = 's32[1]{0}', space=sflag, size = 0x4, scoped, tag = 'scoped memory for tpu_custom_call.1']
    #allocation4 [shape = 's32[1]{0}', space=sflag, size = 0x4, scoped, tag = 'scoped memory for tpu_custom_call.1']
    #allocation5 [shape = 'u8[16384]{0}', space=vmem, size = 0x4000, scoped, tag = 'input window, operand 1, single buffered']
    #allocation6 [shape = 's32[1]{0}', space=sflag, size = 0x4, scoped, tag = 'scoped memory for tpu_custom_call.1']
    #allocation7 [shape = 'u8[65536]{0}', space=vmem, size = 0x10000, scoped, tag = 'input window, operand 3, single buffered']
    #allocation8 [shape = 'u8[4096]{0}', space=vmem, size = 0x1000, scoped, tag = 'output window, operand 0, single buffered']
    %10 = vsyncpa [#allocation3], 0
    %11 = vsyncpa [#allocation6], 0
    %12 = vsyncpa [#allocation4], 0
    // Predicated region
    $region2: #{tpu_custom_call.1} parent=1 // pred_check
      _
    $region3: #{tpu_custom_call.1} parent=1 // pred_check_branch
      %14 = sbr.rel (0) target = $region5
    $region4: #{tpu_custom_call.1} parent=1 // pred_region
      %s16 = ssub.s32 128, 128
      %17 = vsyncadd [#allocation3], %s16
      %s19 = sshll.u32 [#allocation2], 4
      %s20 = int_to_ptr.vmem [resolvable:$true] %s19
      %22 = dma.hbm_to_vmem [thread:$0]  %s0, 128, %s20, [#allocation3]
    $region5: #{tpu_custom_call.1} parent=1 // pred_fallthru
      _
    // Predicated region
    $region6: #{tpu_custom_call.1} parent=1 // pred_check
      _
    $region7: #{tpu_custom_call.1} parent=1 // pred_check_branch
      %24 = sbr.rel (0) target = $region9
    $region8: #{tpu_custom_call.1} parent=1 // pred_region
      %s26 = ssub.s32 512, 512
      %27 = vsyncadd [#allocation6], %s26
      %s28 = sshll.u32 [#allocation5], 4
      %s29 = int_to_ptr.vmem [resolvable:$true] %s28
      %34 = dma.hbm_to_vmem [thread:$0]  %s1, 512, %s29, [#allocation6], 128, 128, 8
    $region9: #{tpu_custom_call.1} parent=1 // pred_fallthru
      _
    // Predicated region
    $region10: #{tpu_custom_call.1} parent=1 // pred_check
      _
    $region11: #{tpu_custom_call.1} parent=1 // pred_check_branch
      %36 = sbr.rel (0) target = $region13
    $region12: #{tpu_custom_call.1} parent=1 // pred_region
      _
    $region13: #{tpu_custom_call.1} parent=1 // pred_fallthru
      _
    // Predicated region
    $region14: #{tpu_custom_call.1} parent=1 // pred_check
      _
    $region15: #{tpu_custom_call.1} parent=1 // pred_check_branch
      %38 = sbr.rel (0) target = $region17
    $region16: #{tpu_custom_call.1} parent=1 // pred_region
      %s40 = ssub.s32 2048, 2048
      %41 = vsyncadd [#allocation6], %s40
      %s42 = sshll.u32 [#allocation7], 4
      %s43 = int_to_ptr.vmem [resolvable:$true] %s42
      %48 = dma.hbm_to_vmem [thread:$0]  %s3, 2048, %s43, [#allocation6], 128, 128, 8
    $region17: #{tpu_custom_call.1} parent=1 // pred_fallthru
      _
    // Predicated region
    $region18: #{tpu_custom_call.1} parent=1 // pred_check
      _
    $region19: #{tpu_custom_call.1} parent=1 // pred_check_branch
      %50 = sbr.rel (0) target = $region21
    $region20: #{tpu_custom_call.1} parent=1 // pred_region
      _
    $region21: #{tpu_custom_call.1} parent=1 // pred_fallthru
      _
    // Predicated region
    $region22: #{tpu_custom_call.1} parent=1 // pred_check
      _
    $region23: #{tpu_custom_call.1} parent=1 // pred_check_branch
      %52 = sbr.rel (0) target = $region25
    $region24: #{tpu_custom_call.1} parent=1 // pred_region
      %53 = dma.done [#allocation3], 128
    $region25: #{tpu_custom_call.1} parent=1 // pred_fallthru
      _
    // Predicated region
    $region26: #{tpu_custom_call.1} parent=1 // pred_check
      _
    $region27: #{tpu_custom_call.1} parent=1 // pred_check_branch
      %55 = sbr.rel (0) target = $region29
    $region28: #{tpu_custom_call.1} parent=1 // pred_region
      %56 = dma.done [#allocation6], 512
    $region29: #{tpu_custom_call.1} parent=1 // pred_fallthru
      _
    // Predicated region
    $region30: #{tpu_custom_call.1} parent=1 // pred_check
      _
    $region31: #{tpu_custom_call.1} parent=1 // pred_check_branch
      %58 = sbr.rel (0) target = $region33
    $region32: #{tpu_custom_call.1} parent=1 // pred_region
      %59 = dma.done [#allocation6], 2048
    $region33: #{tpu_custom_call.1} parent=1 // pred_fallthru
      _
    %v60 = vld [vmem:[#allocation2] sm:$0xff]
    %v61 = vld [vmem:[#allocation5] sm:$0xff]
    %v62 = vld [vmem:[#allocation5 + $0x8] sm:$0xff]
    %v63 = vld [vmem:[#allocation5 + $0x10] sm:$0xff]
    %v64 = vld [vmem:[#allocation5 + $0x18] sm:$0xff]
    %v65 = vld [vmem:[%s2] sm:$0x1]
    %v67 = vlaneseq
    %v68 = vshrl.u32 %v67, 7
    %v69 = vsub.s32 0, %v68
    %v70 = vrot.slane %v65, %v69
    %vm72 = vcmask 261120
    %v74 = vsel %vm72, %v60, 0
    %76 = vmatprep.subr.mxu0 0.0
    %77 = vmatpush1.msra.mxu0 0.0
    %78 = vmatprep.subr.mxu0 0.0
    %79 = vmatpush1.msra.mxu0 0.0
    %80 = vmatprep.subr.mxu0 0.0
    %81 = vmatpush1.msra.mxu0 0.0
    %82 = vmatprep.subr.mxu0 0.0
    %83 = vmatpush1.msra.mxu0 0.0
    %84 = vmatprep.subr.mxu0 0.0
    %85 = vmatpush1.msra.mxu0 0.0
    %86 = vmatprep.subr.mxu0 0.0
    %87 = vmatpush1.msra.mxu0 0.0
    %88 = vmatprep.subr.mxu0 0.0
    %89 = vmatpush1.msra.mxu0 0.0
    %90 = vmatprep.subr.mxu0 0.0
    %91 = vmatpush1.msra.mxu0 0.0
    %92 = vmatprep.subr.mxu0 0.0
    %93 = vmatpush1.msra.mxu0 0.0
    %94 = vmatprep.subr.mxu0 0.0
    %95 = vmatpush1.msra.mxu0 0.0
    %96 = vmatprep.subr.mxu0 0.0
    %97 = vmatpush1.msra.mxu0 0.0
    %98 = vmatprep.subr.mxu0 0.0
    %99 = vmatpush1.msra.mxu0 0.0
    %100 = vmatprep.subr.mxu0 0.0
    %101 = vmatpush1.msra.mxu0 %v64
    %102 = vmatprep.subr.mxu0 0.0
    %103 = vmatpush1.msra.mxu0 %v63
    %104 = vmatprep.subr.mxu0 0.0
    %105 = vmatpush1.msra.mxu0 %v62
    %106 = vmatprep.subr.mxu0 0.0
    %107 = vmatpush1.msra.mxu0 %v61
    %108 = vmatprep.subr.mxu0 0.0
    %109 = vmatpush2.msra.mxu0 0.0
    %110 = vmatprep.subr.mxu0 0.0
    %111 = vmatpush2.msra.mxu0 0.0
    %112 = vmatprep.subr.mxu0 0.0
    %113 = vmatpush2.msra.mxu0 0.0
    %114 = vmatprep.subr.mxu0 0.0
    %115 = vmatpush2.msra.mxu0 0.0
    %116 = vmatprep.subr.mxu0 0.0
    %117 = vmatpush2.msra.mxu0 0.0
    %118 = vmatprep.subr.mxu0 0.0
    %119 = vmatpush2.msra.mxu0 0.0
    %120 = vmatprep.subr.mxu0 0.0
    %121 = vmatpush2.msra.mxu0 0.0
    %122 = vmatprep.subr.mxu0 0.0
    %123 = vmatpush2.msra.mxu0 0.0
    %124 = vmatprep.subr.mxu0 0.0
    %125 = vmatpush2.msra.mxu0 0.0
    %126 = vmatprep.subr.mxu0 0.0
    %127 = vmatpush2.msra.mxu0 0.0
    %128 = vmatprep.subr.mxu0 0.0
    %129 = vmatpush2.msra.mxu0 0.0
    %130 = vmatprep.subr.mxu0 0.0
    %131 = vmatpush2.msra.mxu0 0.0
    %132 = vmatprep.subr.mxu0 0.0
    %133 = vmatpush2.msra.mxu0 0.0
    %134 = vmatprep.subr.mxu0 0.0
    %135 = vmatpush2.msra.mxu0 0.0
    %136 = vmatprep.subr.mxu0 0.0
    %137 = vmatpush2.msra.mxu0 0.0
    %138 = vmatprep.subr.mxu0 0.0
    %139 = vmatpush2.msra.mxu0 0.0
    %140 = vmatprep.mubr.f32.mxu0 0.0
    %141 = vmatmul.mubr.f32.gmra.mxu0 %v74
    %v142 = vpop.f32.mrf.mxu0
    %v143 = vadd.f32 %v70, %v142
    %v144 = vpop.f32.mrf.mxu0
    %145 = vdwg.mxu0
    %v146 = vmax.f32 %v143, 0.0
    %v147 = vld [vmem:[#allocation7] sm:$0xff]
    %v148 = vld [vmem:[#allocation7 + $0x8] sm:$0xff]
    %v149 = vld [vmem:[#allocation7 + $0x10] sm:$0xff]
    %v150 = vld [vmem:[#allocation7 + $0x18] sm:$0xff]
    %v151 = vld [vmem:[#allocation7 + $0x20] sm:$0xff]
    %v152 = vld [vmem:[#allocation7 + $0x28] sm:$0xff]
    %v153 = vld [vmem:[#allocation7 + $0x30] sm:$0xff]
    %v154 = vld [vmem:[#allocation7 + $0x38] sm:$0xff]
    %v155 = vld [vmem:[#allocation7 + $0x40] sm:$0xff]
    %v156 = vld [vmem:[#allocation7 + $0x48] sm:$0xff]
    %v157 = vld [vmem:[#allocation7 + $0x50] sm:$0xff]
    %v158 = vld [vmem:[#allocation7 + $0x58] sm:$0xff]
    %v159 = vld [vmem:[#allocation7 + $0x60] sm:$0xff]
    %v160 = vld [vmem:[#allocation7 + $0x68] sm:$0xff]
    %v161 = vld [vmem:[#allocation7 + $0x70] sm:$0xff]
    %v162 = vld [vmem:[#allocation7 + $0x78] sm:$0xff]
    %v163 = vld [vmem:[%s4] sm:$0x1]
    %v165 = vlaneseq
    %v166 = vshrl.u32 %v165, 7
    %v167 = vsub.s32 0, %v166
    %v168 = vrot.slane %v163, %v167
    %170 = vmatprep.subr.mxu0 0.0
    %171 = vmatpush1.msra.mxu0 %v162
    %172 = vmatprep.subr.mxu0 0.0
    %173 = vmatpush1.msra.mxu0 %v161
    %174 = vmatprep.subr.mxu0 0.0
    %175 = vmatpush1.msra.mxu0 %v160
    %176 = vmatprep.subr.mxu0 0.0
    %177 = vmatpush1.msra.mxu0 %v159
    %178 = vmatprep.subr.mxu0 0.0
    %179 = vmatpush1.msra.mxu0 %v158
    %180 = vmatprep.subr.mxu0 0.0
    %181 = vmatpush1.msra.mxu0 %v157
    %182 = vmatprep.subr.mxu0 0.0
    %183 = vmatpush1.msra.mxu0 %v156
    %184 = vmatprep.subr.mxu0 0.0
    %185 = vmatpush1.msra.mxu0 %v155
    %186 = vmatprep.subr.mxu0 0.0
    %187 = vmatpush1.msra.mxu0 %v154
    %188 = vmatprep.subr.mxu0 0.0
    %189 = vmatpush1.msra.mxu0 %v153
    %190 = vmatprep.subr.mxu0 0.0
    %191 = vmatpush1.msra.mxu0 %v152
    %192 = vmatprep.subr.mxu0 0.0
    %193 = vmatpush1.msra.mxu0 %v151
    %194 = vmatprep.subr.mxu0 0.0
    %195 = vmatpush1.msra.mxu0 %v150
    %196 = vmatprep.subr.mxu0 0.0
    %197 = vmatpush1.msra.mxu0 %v149
    %198 = vmatprep.subr.mxu0 0.0
    %199 = vmatpush1.msra.mxu0 %v148
    %200 = vmatprep.subr.mxu0 0.0
    %201 = vmatpush1.msra.mxu0 %v147
    %202 = vmatprep.subr.mxu0 0.0
    %203 = vmatpush2.msra.mxu0 0.0
    %204 = vmatprep.subr.mxu0 0.0
    %205 = vmatpush2.msra.mxu0 0.0
    %206 = vmatprep.subr.mxu0 0.0
    %207 = vmatpush2.msra.mxu0 0.0
    %208 = vmatprep.subr.mxu0 0.0
    %209 = vmatpush2.msra.mxu0 0.0
    %210 = vmatprep.subr.mxu0 0.0
    %211 = vmatpush2.msra.mxu0 0.0
    %212 = vmatprep.subr.mxu0 0.0
    %213 = vmatpush2.msra.mxu0 0.0
    %214 = vmatprep.subr.mxu0 0.0
    %215 = vmatpush2.msra.mxu0 0.0
    %216 = vmatprep.subr.mxu0 0.0
    %217 = vmatpush2.msra.mxu0 0.0
    %218 = vmatprep.subr.mxu0 0.0
    %219 = vmatpush2.msra.mxu0 0.0
    %220 = vmatprep.subr.mxu0 0.0
    %221 = vmatpush2.msra.mxu0 0.0
    %222 = vmatprep.subr.mxu0 0.0
    %223 = vmatpush2.msra.mxu0 0.0
    %224 = vmatprep.subr.mxu0 0.0
    %225 = vmatpush2.msra.mxu0 0.0
    %226 = vmatprep.subr.mxu0 0.0
    %227 = vmatpush2.msra.mxu0 0.0
    %228 = vmatprep.subr.mxu0 0.0
    %229 = vmatpush2.msra.mxu0 0.0
    %230 = vmatprep.subr.mxu0 0.0
    %231 = vmatpush2.msra.mxu0 0.0
    %232 = vmatprep.subr.mxu0 0.0
    %233 = vmatpush2.msra.mxu0 0.0
    %234 = vmatprep.mubr.f32.mxu0 0.0
    %235 = vmatmul.mubr.f32.gmra.mxu0 %v146
    %v236 = vpop.f32.mrf.mxu0
    %v237 = vadd.f32 %v168, %v236
    %v238 = vpop.f32.mrf.mxu0
    %239 = vdwg.mxu0
    %240 = vst [vmem:[#allocation8] sm:$0xff] %v237
    // Predicated region
    $region34: #{tpu_custom_call.1} parent=1 // pred_check
      _
    $region35: #{tpu_custom_call.1} parent=1 // pred_check_branch
      %242 = sbr.rel (0) target = $region37
    $region36: #{tpu_custom_call.1} parent=1 // pred_region
      %s244 = ssub.s32 128, 128
      %245 = vsyncadd [#allocation4], %s244
      %s247 = sshll.u32 [#allocation8], 4
      %s248 = int_to_ptr.vmem [resolvable:$true] %s247
      %250 = dma.vmem_to_hbm [thread:$0]  %s248, 128, %s5, [#allocation4]
    $region37: #{tpu_custom_call.1} parent=1 // pred_fallthru
      _
    // Predicated region
    $region38: #{tpu_custom_call.1} parent=1 // pred_check
      _
    $region39: #{tpu_custom_call.1} parent=1 // pred_check_branch
      %252 = sbr.rel (0) target = $region41
    $region40: #{tpu_custom_call.1} parent=1 // pred_region
      %253 = dma.done [#allocation4], 128
    $region41: #{tpu_custom_call.1} parent=1 // pred_fallthru
      _
    %254 = vsyncpa [#allocation3], 1
    %255 = vsyncpa [#allocation6], 1
    %256 = vsyncpa [#allocation4], 1

</llo_original>
